<compile_context>
chip_gen: v6e
topology: v6e:2x2x1
jax: 0.10.0
libtpu: 0.0.40
codegen_flags: <defaults>
</compile_context>

<pallas_src>
import functools

import jax
import jax.numpy as jnp
from jax.experimental import pallas as pl
from jax.experimental.pallas import tpu as pltpu


def policy_kernel(x_ref, w1_ref, b1_ref, w2_ref, b2_ref, o_ref):
    # fc1 + ReLU  (MXU matmul, f32 accumulation; hidden dim is lane-dense)
    h = jnp.dot(x_ref[...], w1_ref[...], preferred_element_type=jnp.float32)
    h = jnp.maximum(h + b1_ref[...], 0.0)          # b1 is (1, hid_pad) -> broadcast
    # fc2 (lane-dense padded N); padded columns get bias -1e30 ("-inf")
    logits = jnp.dot(h, w2_ref[...], preferred_element_type=jnp.float32)
    logits = logits + b2_ref[...]                  # b2 is (1, out_pad)
    # numerically stable softmax over last dim; padded cols -> exp(-huge) = 0
    m = jnp.max(logits, axis=-1, keepdims=True)
    e = jnp.exp(logits - m)
    denom = jnp.sum(e, axis=-1, keepdims=True)
    inv = pl.reciprocal(denom, approx=True)        # EUP, frees VALU slots
    o_ref[...] = (e * inv).astype(o_ref.dtype)


def _round_up(n, m):
    return ((n + m - 1) // m) * m


@functools.partial(jax.jit, static_argnames=("block_batch",))
def policy_network(x, w1, b1, w2, b2, *, block_batch=512):
    """softmax(relu(x @ w1 + b1) @ w2 + b2) via a batch-gridded Pallas kernel."""
    batch, input_dim = x.shape
    hidden_dim = w1.shape[1]
    output_dim = w2.shape[1]

    # --- lane-dense padding of hidden and output dims (multiples of 128) -------
    hid_pad = _round_up(hidden_dim, 128)
    out_pad = _round_up(output_dim, 128)

    # W1 / b1: zero-pad extra hidden units -> h[:, pad] = relu(0) = 0.
    w1_p = jnp.zeros((input_dim, hid_pad), jnp.float32).at[:, :hidden_dim].set(w1)
    b1_p = jnp.zeros((1, hid_pad), jnp.float32).at[:, :hidden_dim].set(b1)
    # W2: zero-pad extra hidden rows (contribute 0) and extra output columns.
    w2_p = jnp.zeros((hid_pad, out_pad), jnp.float32).at[:hidden_dim, :output_dim].set(w2)
    # Padded logit columns get a huge negative bias so softmax ignores them.
    b2_p = jnp.full((1, out_pad), -1e30, jnp.float32).at[:, :output_dim].set(b2)

    # --- batch tiling -----------------------------------------------------------
    tb = min(block_batch, max(batch, 1))
    tb = max(8, _round_up(tb, 8))                  # multiple of 8 (f32 sublane)
    batch_pad = pl.cdiv(batch, tb) * tb
    if batch_pad != batch:
        x = jnp.pad(x, ((0, batch_pad - batch), (0, 0)))
    grid = (batch_pad // tb,)

    out = pl.pallas_call(
        policy_kernel,
        out_shape=jax.ShapeDtypeStruct((batch_pad, out_pad), jnp.float32),
        grid=grid,
        in_specs=[
            pl.BlockSpec((tb, input_dim), lambda i: (i, 0)),        # x: tiled over batch
            pl.BlockSpec((input_dim, hid_pad), lambda i: (0, 0)),   # w1 (padded): resident
            pl.BlockSpec((1, hid_pad), lambda i: (0, 0)),           # b1 (padded): resident
            pl.BlockSpec((hid_pad, out_pad), lambda i: (0, 0)),     # w2 (padded): resident
            pl.BlockSpec((1, out_pad), lambda i: (0, 0)),           # b2 (padded): resident
        ],
        out_specs=pl.BlockSpec((tb, out_pad), lambda i: (i, 0)),    # lane-dense store
        compiler_params=pltpu.CompilerParams(
            dimension_semantics=("parallel",),     # shard batch loop across TCs (v7x)
            vmem_limit_bytes=32 * 1024 * 1024,     # safe on v5e/v6e/v7x
        ),
    )(x, w1_p, b1_p, w2_p, b2_p)

    return out[:batch, :output_dim]


def init_params(key, input_dim, hidden_dim, output_dim):
    # Deterministic init mirroring nn.Linear's default U(-1/sqrt(fan_in), 1/sqrt(fan_in)).
    k1, k2, k3, k4 = jax.random.split(key, 4)
    bound1 = 1.0 / jnp.sqrt(jnp.float32(input_dim))
    bound2 = 1.0 / jnp.sqrt(jnp.float32(hidden_dim))
    w1 = jax.random.uniform(k1, (input_dim, hidden_dim), jnp.float32, -bound1, bound1)
    b1 = jax.random.uniform(k2, (1, hidden_dim), jnp.float32, -bound1, bound1)
    w2 = jax.random.uniform(k3, (hidden_dim, output_dim), jnp.float32, -bound2, bound2)
    b2 = jax.random.uniform(k4, (1, output_dim), jnp.float32, -bound2, bound2)
    return w1, b1, w2, b2


def _reference(x, w1, b1, w2, b2):
    h = jnp.maximum(x @ w1 + b1, 0.0)
    return jax.nn.softmax(h @ w2 + b2, axis=-1)


if __name__ == "__main__":
    input_dim, hidden_dim, output_dim = 16, 32, 8
    key = jax.random.PRNGKey(0)
    kx, kp, kx2 = jax.random.split(key, 3)
    w1, b1, w2, b2 = init_params(kp, input_dim, hidden_dim, output_dim)

    # Small-batch case (matches original test sizes).
    x = jax.random.normal(kx, (2, input_dim), jnp.float32)
    out = policy_network(x, w1, b1, w2, b2)
    jax.block_until_ready(out)
    ref = _reference(x, w1, b1, w2, b2)
    assert out.shape == (2, output_dim)
    # approx reciprocal on the EUP -> slightly looser tolerance than exact divide
    assert jnp.allclose(out, ref, atol=2e-3, rtol=2e-3)
    assert jnp.allclose(jnp.sum(out, axis=-1), 1.0, atol=2e-3)

    # Larger, non-multiple batch to exercise the grid + padding path.
    xl = jax.random.normal(kx2, (1037, input_dim), jnp.float32)
    outl = policy_network(xl, w1, b1, w2, b2)
    jax.block_until_ready(outl)
    refl = _reference(xl, w1, b1, w2, b2)
    assert outl.shape == (1037, output_dim)
    assert jnp.allclose(outl, refl, atol=2e-3, rtol=2e-3)
    assert jnp.allclose(jnp.sum(outl, axis=-1), 1.0, atol=2e-3)

    print("KERNEL_OK")
</pallas_src>

<mosaic_0001>
module attributes {stable_mosaic.version = 11 : i64} {
  func.func @policy_kernel(%arg0: i32, %arg1: memref<8x16xf32, #tpu.memory_space<vmem>>, %arg2: memref<16x128xf32, #tpu.memory_space<vmem>>, %arg3: memref<1x128xf32, #tpu.memory_space<vmem>>, %arg4: memref<128x128xf32, #tpu.memory_space<vmem>>, %arg5: memref<1x128xf32, #tpu.memory_space<vmem>>, %arg6: memref<8x128xf32, #tpu.memory_space<vmem>>) attributes {dimension_semantics = [#tpu.dimension_semantics<parallel>], iteration_bounds = array<i64: 1>, scalar_prefetch = 0 : i64, scratch_operands = 0 : i64, tpu.core_type = #tpu.core_type<tc>, window_params = [{transform_indices = @transform_0, window_bounds = array<i64: 8, 16>}, {pipeline_mode = #tpu.pipeline_mode<synchronous>, transform_indices = @transform_1, window_bounds = array<i64: 16, 128>}, {pipeline_mode = #tpu.pipeline_mode<synchronous>, transform_indices = @transform_2, window_bounds = array<i64: 1, 128>}, {pipeline_mode = #tpu.pipeline_mode<synchronous>, transform_indices = @transform_3, window_bounds = array<i64: 128, 128>}, {pipeline_mode = #tpu.pipeline_mode<synchronous>, transform_indices = @transform_4, window_bounds = array<i64: 1, 128>}, {transform_indices = @transform_5, window_bounds = array<i64: 8, 128>}]} {
    %c0 = arith.constant 0 : index
    %c0_0 = arith.constant 0 : index
    %0 = vector.load %arg1[%c0, %c0_0] : memref<8x16xf32, #tpu.memory_space<vmem>>, vector<8x16xf32>
    %c0_1 = arith.constant 0 : index
    %c0_2 = arith.constant 0 : index
    %1 = vector.load %arg2[%c0_1, %c0_2] : memref<16x128xf32, #tpu.memory_space<vmem>>, vector<16x128xf32>
    %cst = arith.constant dense<0.000000e+00> : vector<8x128xf32>
    %2 = tpu.matmul %0, %1, %cst {dimension_numbers = #tpu.dot_dimension_numbers<[1], [0], [0], [1], [0, 0, 1, 1], [], []>} : vector<8x16xf32>, vector<16x128xf32>, vector<8x128xf32> -> vector<8x128xf32>
    %c0_3 = arith.constant 0 : index
    %c0_4 = arith.constant 0 : index
    %3 = vector.load %arg3[%c0_3, %c0_4] : memref<1x128xf32, #tpu.memory_space<vmem>>, vector<1x128xf32>
    %4 = vector.broadcast %3 : vector<1x128xf32> to vector<8x128xf32>
    %5 = arith.addf %2, %4 : vector<8x128xf32>
    %cst_5 = arith.constant 0.000000e+00 : f32
    %6 = vector.broadcast %cst_5 : f32 to vector<8x128xf32>
    %7 = arith.maximumf %5, %6 : vector<8x128xf32>
    %c0_6 = arith.constant 0 : index
    %c0_7 = arith.constant 0 : index
    %8 = vector.load %arg4[%c0_6, %c0_7] : memref<128x128xf32, #tpu.memory_space<vmem>>, vector<128x128xf32>
    %cst_8 = arith.constant dense<0.000000e+00> : vector<8x128xf32>
    %9 = tpu.matmul %7, %8, %cst_8 {dimension_numbers = #tpu.dot_dimension_numbers<[1], [0], [0], [1], [0, 0, 1, 1], [], []>} : vector<8x128xf32>, vector<128x128xf32>, vector<8x128xf32> -> vector<8x128xf32>
    %c0_9 = arith.constant 0 : index
    %c0_10 = arith.constant 0 : index
    %10 = vector.load %arg5[%c0_9, %c0_10] : memref<1x128xf32, #tpu.memory_space<vmem>>, vector<1x128xf32>
    %11 = vector.broadcast %10 : vector<1x128xf32> to vector<8x128xf32>
    %12 = arith.addf %9, %11 : vector<8x128xf32>
    %cst_11 = arith.constant dense<0xFF800000> : vector<8xf32>
    %13 = vector.multi_reduction <maximumf>, %12, %cst_11 [1] : vector<8x128xf32> to vector<8xf32>
    %14 = vector.shape_cast %13 : vector<8xf32> to vector<8x1xf32>
    %15 = vector.broadcast %14 : vector<8x1xf32> to vector<8x128xf32>
    %16 = arith.subf %12, %15 : vector<8x128xf32>
    %17 = math.exp %16 : vector<8x128xf32>
    %cst_12 = arith.constant dense<0.000000e+00> : vector<8xf32>
    %18 = vector.multi_reduction <add>, %17, %cst_12 [1] : vector<8x128xf32> to vector<8xf32>
    %19 = vector.shape_cast %18 : vector<8xf32> to vector<8x1xf32>
    %20 = tpu.reciprocal %19 {approx = true} : vector<8x1xf32> -> vector<8x1xf32>
    %21 = vector.broadcast %20 : vector<8x1xf32> to vector<8x128xf32>
    %22 = arith.mulf %17, %21 : vector<8x128xf32>
    %c0_13 = arith.constant 0 : index
    %c0_14 = arith.constant 0 : index
    %23 = vector.load %arg6[%c0_13, %c0_14] : memref<8x128xf32, #tpu.memory_space<vmem>>, vector<8x128xf32>
    tpu.vector_store %arg6[%c0_13, %c0_14], %22 {strides = array<i32>} : memref<8x128xf32, #tpu.memory_space<vmem>>, vector<8x128xf32>,
    return
  }
  func.func @transform_0(%arg0: i32) -> (i32, i32) {
    %c0_i32 = arith.constant 0 : i32
    %c0_i32_0 = arith.constant 0 : i32
    return %arg0, %c0_i32 : i32, i32
  }
  func.func @transform_1(%arg0: i32) -> (i32, i32) {
    %c0_i32 = arith.constant 0 : i32
    %c0_i32_0 = arith.constant 0 : i32
    %c0_i32_1 = arith.constant 0 : i32
    return %c0_i32, %c0_i32_0 : i32, i32
  }
  func.func @transform_2(%arg0: i32) -> (i32, i32) {
    %c0_i32 = arith.constant 0 : i32
    %c0_i32_0 = arith.constant 0 : i32
    %c0_i32_1 = arith.constant 0 : i32
    return %c0_i32, %c0_i32_0 : i32, i32
  }
  func.func @transform_3(%arg0: i32) -> (i32, i32) {
    %c0_i32 = arith.constant 0 : i32
    %c0_i32_0 = arith.constant 0 : i32
    %c0_i32_1 = arith.constant 0 : i32
    return %c0_i32, %c0_i32_0 : i32, i32
  }
  func.func @transform_4(%arg0: i32) -> (i32, i32) {
    %c0_i32 = arith.constant 0 : i32
    %c0_i32_0 = arith.constant 0 : i32
    %c0_i32_1 = arith.constant 0 : i32
    return %c0_i32, %c0_i32_0 : i32, i32
  }
  func.func @transform_5(%arg0: i32) -> (i32, i32) {
    %c0_i32 = arith.constant 0 : i32
    %c0_i32_0 = arith.constant 0 : i32
    return %arg0, %c0_i32 : i32, i32
  }
}

</mosaic_0001>

<llo_original>
// kernel: policy_network.1
$region0: #{policy_network.1}
  #allocation0 [shape = 'u32[]', space=smem, size = 0x4, offset = 0x4, fixed_abs, tag = 'smem constant byte address 0x4 - core index']
  #allocation1 [shape = 'u32[144,128]{1,0:T(1,128)}', space=vmem, size = 0x12000, scoped, tag = 'internal scratch']
  %s0 = inlined_call_operand.vmem [shape: f32[8,16], index: 0, kind: input, shape index: {}]
  %s1 = inlined_call_operand.vmem [shape: f32[16,128], index: 1, kind: input, shape index: {}]
  %s2 = inlined_call_operand.vmem [shape: f32[1,128], index: 2, kind: input, shape index: {}]
  %s3 = inlined_call_operand.vmem [shape: f32[128,128], index: 3, kind: input, shape index: {}]
  %s4 = inlined_call_operand.vmem [shape: f32[1,128], index: 4, kind: input, shape index: {}]
  %s5 = inlined_call_operand.vmem [shape: f32[8,128], index: 5, kind: output, shape index: {}]
  %s6 = sld [smem:[#allocation0]]
  $region30: #{policy_network.1} parent=0
    _
  %s8 = ssub.s32 1, %s6
  %s9 = scalar_select 0, %s8, %s6
  // Predicated region
  $region2: #{policy_network.1} parent=0 // pred_check
    _
  $region3: #{policy_network.1} parent=0 // pred_check_branch
    %11 = sbr.rel (0) target = $region5
  $region4: #{policy_network.1} parent=0 // pred_region
    _
  $region5: #{policy_network.1} parent=0 // pred_fallthru
    _
  // Predicated region
  $region6: #{policy_network.1} parent=0 // pred_check
    _
  $region7: #{policy_network.1} parent=0 // pred_check_branch
    %13 = sbr.rel (0) target = $region9
  $region8: #{policy_network.1} parent=0 // pred_region
    _
  $region9: #{policy_network.1} parent=0 // pred_fallthru
    _
  // Predicated region
  $region10: #{policy_network.1} parent=0 // pred_check
    _
  $region11: #{policy_network.1} parent=0 // pred_check_branch
    %15 = sbr.rel (0) target = $region13
  $region12: #{policy_network.1} parent=0 // pred_region
    _
  $region13: #{policy_network.1} parent=0 // pred_fallthru
    _
  // Predicated region
  $region14: #{policy_network.1} parent=0 // pred_check
    _
  $region15: #{policy_network.1} parent=0 // pred_check_branch
    %17 = sbr.rel (0) target = $region17
  $region16: #{policy_network.1} parent=0 // pred_region
    _
  $region17: #{policy_network.1} parent=0 // pred_fallthru
    _
  // Predicated region
  $region18: #{policy_network.1} parent=0 // pred_check
    _
  $region19: #{policy_network.1} parent=0 // pred_check_branch
    %19 = sbr.rel (0) target = $region21
  $region20: #{policy_network.1} parent=0 // pred_region
    _
  $region21: #{policy_network.1} parent=0 // pred_fallthru
    _
  %v20 = vld [vmem:[%s0] sm:$0xff]
  %v21 = vld [vmem:[%s1] sm:$0xff]
  %v22 = vld [vmem:[%s1 + $0x8] sm:$0xff]
  %v23 = vld [vmem:[%s2] sm:$0x1]
  %v25 = vlaneseq
  %v26 = vshrl.u32 %v25, 7
  %v27 = vsub.s32 0, %v26
  %v28 = vrot.slane %v23, %v27
  %vm30 = vcmask 130048
  %v32 = vsel %vm30, %v20, 0
  %34 = vmatprep.subr.mxu0 0.0
  %35 = vmatpush1.msra.mxu0 0.0
  %36 = vmatprep.subr.mxu0 0.0
  %37 = vmatpush1.msra.mxu0 0.0
  %38 = vmatprep.subr.mxu0 0.0
  %39 = vmatpush1.msra.mxu0 0.0
  %40 = vmatprep.subr.mxu0 0.0
  %41 = vmatpush1.msra.mxu0 0.0
  %42 = vmatprep.subr.mxu0 0.0
  %43 = vmatpush1.msra.mxu0 0.0
  %44 = vmatprep.subr.mxu0 0.0
  %45 = vmatpush1.msra.mxu0 0.0
  %46 = vmatprep.subr.mxu0 0.0
  %47 = vmatpush1.msra.mxu0 0.0
  %48 = vmatprep.subr.mxu0 0.0
  %49 = vmatpush1.msra.mxu0 0.0
  %50 = vmatprep.subr.mxu0 0.0
  %51 = vmatpush1.msra.mxu0 0.0
  %52 = vmatprep.subr.mxu0 0.0
  %53 = vmatpush1.msra.mxu0 0.0
  %54 = vmatprep.subr.mxu0 0.0
  %55 = vmatpush1.msra.mxu0 0.0
  %56 = vmatprep.subr.mxu0 0.0
  %57 = vmatpush1.msra.mxu0 0.0
  %58 = vmatprep.subr.mxu0 0.0
  %59 = vmatpush1.msra.mxu0 0.0
  %60 = vmatprep.subr.mxu0 0.0
  %61 = vmatpush1.msra.mxu0 0.0
  %62 = vmatprep.subr.mxu0 0.0
  %63 = vmatpush1.msra.mxu0 %v22
  %64 = vmatprep.subr.mxu0 0.0
  %65 = vmatpush1.msra.mxu0 %v21
  %66 = vmatprep.subr.mxu0 0.0
  %67 = vmatpush2.msra.mxu0 0.0
  %68 = vmatprep.subr.mxu0 0.0
  %69 = vmatpush2.msra.mxu0 0.0
  %70 = vmatprep.subr.mxu0 0.0
  %71 = vmatpush2.msra.mxu0 0.0
  %72 = vmatprep.subr.mxu0 0.0
  %73 = vmatpush2.msra.mxu0 0.0
  %74 = vmatprep.subr.mxu0 0.0
  %75 = vmatpush2.msra.mxu0 0.0
  %76 = vmatprep.subr.mxu0 0.0
  %77 = vmatpush2.msra.mxu0 0.0
  %78 = vmatprep.subr.mxu0 0.0
  %79 = vmatpush2.msra.mxu0 0.0
  %80 = vmatprep.subr.mxu0 0.0
  %81 = vmatpush2.msra.mxu0 0.0
  %82 = vmatprep.subr.mxu0 0.0
  %83 = vmatpush2.msra.mxu0 0.0
  %84 = vmatprep.subr.mxu0 0.0
  %85 = vmatpush2.msra.mxu0 0.0
  %86 = vmatprep.subr.mxu0 0.0
  %87 = vmatpush2.msra.mxu0 0.0
  %88 = vmatprep.subr.mxu0 0.0
  %89 = vmatpush2.msra.mxu0 0.0
  %90 = vmatprep.subr.mxu0 0.0
  %91 = vmatpush2.msra.mxu0 0.0
  %92 = vmatprep.subr.mxu0 0.0
  %93 = vmatpush2.msra.mxu0 0.0
  %94 = vmatprep.subr.mxu0 0.0
  %95 = vmatpush2.msra.mxu0 0.0
  %96 = vmatprep.subr.mxu0 0.0
  %97 = vmatpush2.msra.mxu0 0.0
  %98 = vmatprep.mubr.f32.mxu0 0.0
  %99 = vmatmul.mubr.f32.gmra.mxu0 %v32
  %v100 = vpop.f32.mrf.mxu0
  %v101 = vadd.f32 %v28, %v100
  %v102 = vpop.f32.mrf.mxu0
  %103 = vdwg.mxu0
  %v104 = vmax.f32 %v101, 0.0
  %v105 = vld [vmem:[%s3] sm:$0xff]
  %v106 = vld [vmem:[%s3 + $0x8] sm:$0xff]
  %v107 = vld [vmem:[%s3 + $0x10] sm:$0xff]
  %v108 = vld [vmem:[%s3 + $0x18] sm:$0xff]
  %v109 = vld [vmem:[%s3 + $0x20] sm:$0xff]
  %v110 = vld [vmem:[%s3 + $0x28] sm:$0xff]
  %v111 = vld [vmem:[%s3 + $0x30] sm:$0xff]
  %v112 = vld [vmem:[%s3 + $0x38] sm:$0xff]
  %v113 = vld [vmem:[%s3 + $0x40] sm:$0xff]
  %v114 = vld [vmem:[%s3 + $0x48] sm:$0xff]
  %v115 = vld [vmem:[%s3 + $0x50] sm:$0xff]
  %v116 = vld [vmem:[%s3 + $0x58] sm:$0xff]
  %v117 = vld [vmem:[%s3 + $0x60] sm:$0xff]
  %v118 = vld [vmem:[%s3 + $0x68] sm:$0xff]
  %v119 = vld [vmem:[%s3 + $0x70] sm:$0xff]
  %v120 = vld [vmem:[%s3 + $0x78] sm:$0xff]
  %v121 = vld [vmem:[%s4] sm:$0x1]
  %v123 = vlaneseq
  %v124 = vshrl.u32 %v123, 7
  %v125 = vsub.s32 0, %v124
  %v126 = vrot.slane %v121, %v125
  %128 = vmatprep.subr.mxu0 0.0
  %129 = vmatpush1.msra.mxu0 %v120
  %130 = vmatprep.subr.mxu0 0.0
  %131 = vmatpush1.msra.mxu0 %v119
  %132 = vmatprep.subr.mxu0 0.0
  %133 = vmatpush1.msra.mxu0 %v118
  %134 = vmatprep.subr.mxu0 0.0
  %135 = vmatpush1.msra.mxu0 %v117
  %136 = vmatprep.subr.mxu0 0.0
  %137 = vmatpush1.msra.mxu0 %v116
  %138 = vmatprep.subr.mxu0 0.0
  %139 = vmatpush1.msra.mxu0 %v115
  %140 = vmatprep.subr.mxu0 0.0
  %141 = vmatpush1.msra.mxu0 %v114
  %142 = vmatprep.subr.mxu0 0.0
  %143 = vmatpush1.msra.mxu0 %v113
  %144 = vmatprep.subr.mxu0 0.0
  %145 = vmatpush1.msra.mxu0 %v112
  %146 = vmatprep.subr.mxu0 0.0
  %147 = vmatpush1.msra.mxu0 %v111
  %148 = vmatprep.subr.mxu0 0.0
  %149 = vmatpush1.msra.mxu0 %v110
  %150 = vmatprep.subr.mxu0 0.0
  %151 = vmatpush1.msra.mxu0 %v109
  %152 = vmatprep.subr.mxu0 0.0
  %153 = vmatpush1.msra.mxu0 %v108
  %154 = vmatprep.subr.mxu0 0.0
  %155 = vmatpush1.msra.mxu0 %v107
  %156 = vmatprep.subr.mxu0 0.0
  %157 = vmatpush1.msra.mxu0 %v106
  %158 = vmatprep.subr.mxu0 0.0
  %159 = vmatpush1.msra.mxu0 %v105
  %160 = vmatprep.subr.mxu0 0.0
  %161 = vmatpush2.msra.mxu0 0.0
  %162 = vmatprep.subr.mxu0 0.0
  %163 = vmatpush2.msra.mxu0 0.0
  %164 = vmatprep.subr.mxu0 0.0
  %165 = vmatpush2.msra.mxu0 0.0
  %166 = vmatprep.subr.mxu0 0.0
  %167 = vmatpush2.msra.mxu0 0.0
  %168 = vmatprep.subr.mxu0 0.0
  %169 = vmatpush2.msra.mxu0 0.0
  %170 = vmatprep.subr.mxu0 0.0
  %171 = vmatpush2.msra.mxu0 0.0
  %172 = vmatprep.subr.mxu0 0.0
  %173 = vmatpush2.msra.mxu0 0.0
  %174 = vmatprep.subr.mxu0 0.0
  %175 = vmatpush2.msra.mxu0 0.0
  %176 = vmatprep.subr.mxu0 0.0
  %177 = vmatpush2.msra.mxu0 0.0
  %178 = vmatprep.subr.mxu0 0.0
  %179 = vmatpush2.msra.mxu0 0.0
  %180 = vmatprep.subr.mxu0 0.0
  %181 = vmatpush2.msra.mxu0 0.0
  %182 = vmatprep.subr.mxu0 0.0
  %183 = vmatpush2.msra.mxu0 0.0
  %184 = vmatprep.subr.mxu0 0.0
  %185 = vmatpush2.msra.mxu0 0.0
  %186 = vmatprep.subr.mxu0 0.0
  %187 = vmatpush2.msra.mxu0 0.0
  %188 = vmatprep.subr.mxu0 0.0
  %189 = vmatpush2.msra.mxu0 0.0
  %190 = vmatprep.subr.mxu0 0.0
  %191 = vmatpush2.msra.mxu0 0.0
  %192 = vmatprep.mubr.f32.mxu0 0.0
  %193 = vmatmul.mubr.f32.gmra.mxu0 %v104
  %v194 = vpop.f32.mrf.mxu0
  %v195 = vadd.f32 %v126, %v194
  %v196 = vpop.f32.mrf.mxu0
  %197 = vdwg.mxu0
  %198 = vmax.xlane.f32.xlu0 %v195
  %v199 = vpop.xlane.xlu0 %198
  %v200 = vsub.f32 %v195, %v199
  %v201 = vmul.f32 %v200, 1.442695
  %v202 = vpow.pop %v201
  %203 = vadd.xlane.f32.xlu0 %v202
  %v204 = vpop.xlane.xlu0 %203
  %v205 = vrcp.pop %v204
  %v206 = vmul.f32 %v202, %v205
  %207 = vst [vmem:[%s5] sm:$0xff] %v206
  // Predicated region
  $region22: #{policy_network.1} parent=0 // pred_check
    _
  $region23: #{policy_network.1} parent=0 // pred_check_branch
    %209 = sbr.rel (0) target = $region25
  $region24: #{policy_network.1} parent=0 // pred_region
    _
  $region25: #{policy_network.1} parent=0 // pred_fallthru
    _
  // Predicated region
  $region26: #{policy_network.1} parent=0 // pred_check
    _
  $region27: #{policy_network.1} parent=0 // pred_check_branch
    %211 = sbr.rel (0) target = $region29
  $region28: #{policy_network.1} parent=0 // pred_region
    _
  $region29: #{policy_network.1} parent=0 // pred_fallthru
    _

</llo_original>
